<compile_context>
chip_gen: v7x
topology: tpu7x:2x2x1
jax: 0.10.0
libtpu: 0.0.40
codegen_flags: <defaults>
</compile_context>

<pallas_src>
import functools

import jax
import jax.numpy as jnp
from jax.experimental import pallas as pl
from jax.experimental.pallas import tpu as pltpu


def _kan_conv_kernel(x_ref, xh_ref, w_ref, o_ref, *, knots, spline_order, offsets,
                     compute_dtype, mm_dtype):
    """One lane-dense tile of padded pixels -> stride-1 KAN-conv output.

    x_ref : (C_in, TN)                  per-pixel input, pixels (flattened b*Hp*Wp) on lanes
    xh_ref: (C_in, HALO)                right halo (next HALO pixel columns) for the gather
    w_ref : (K, C_out_pad, (GS+1)*C_in) per-kernel-offset packed weights [base | spline g]
    o_ref : (C_out_pad, TN)             stride-1 conv output on the padded pixel grid
    """
    x = jnp.concatenate([x_ref[...], xh_ref[...]], axis=1).astype(compute_dtype)

    # Base branch: SiLU (sigmoid goes to the EUP slot, the multiply to the VPU).
    silu = x * jax.nn.sigmoid(x)

    # Order-0 bases as differences of step functions (knots strictly increasing):
    #   B0_g = [x >= knots[g]] - [x >= knots[g+1]]  ==  [knots[g] <= x < knots[g+1]].
    step = [(x >= kv).astype(compute_dtype) for kv in knots]
    bases = [step[g] - step[g + 1] for g in range(len(knots) - 1)]

    # Uniform-knot Cox-de Boor, strength reduced (no divides, t_{g+1} reuses t_g):
    #   t_g = (x - knots[g]) / (k*h) = t_0 - g/k,   1 - t_{g+1} = (1 + 1/k) - t_g
    #   B^k_g = t_g * (B_g - B_{g+1}) + (1 + 1/k) * B_{g+1}
    h = knots[1] - knots[0]
    for k in range(1, spline_order + 1):
        t0 = (x - knots[0]) * (1.0 / (k * h))
        ck = 1.0 + 1.0 / k
        bases = [
            (t0 - (g / k)) * (bases[g] - bases[g + 1]) + ck * bases[g + 1]
            for g in range(len(bases) - 1)
        ]

    # Per-pixel feature map phi: rows = [SiLU(x); B_0; ...; B_{GS-1}] per input channel.
    phi = jnp.concatenate(
        [silu.astype(mm_dtype)] + [b.astype(mm_dtype) for b in bases], axis=0)

    # Conv gather: kh*kw lane-shifted slices of phi, one accumulating MXU matmul each
    # (no (kh*kw*Gf, TN) activation buffer is materialized).
    tn = o_ref.shape[-1]
    acc = jnp.zeros(o_ref.shape, jnp.float32)
    for kidx, off in enumerate(offsets):
        acc = acc + jnp.dot(w_ref[kidx], phi[:, off:off + tn],
                            preferred_element_type=jnp.float32)
    o_ref[...] = acc


def kan_conv2d(
    x,
    base_w,          # (C_out, C_in, K)       base_weight of KANLinear idx c_out*C_in + c_in
    spline_w,        # (C_out, C_in, K, G+S)  spline_weight
    spline_scaler,   # (C_out, C_in, K)       standalone spline scaler
    *,
    kernel_size=(2, 2),
    stride=(1, 1),
    padding=(0, 0),
    dilation=(1, 1),
    grid_size=5,
    spline_order=3,
    grid_range=(-1.0, 1.0),
    tile_n=2048,
    matmul_dtype=jnp.bfloat16,   # bf16 weights/features, f32 MXU accumulation (perf review)
    compute_dtype=jnp.float32,   # set jnp.bfloat16 on v6e/v7x for ~2x VPU spline throughput
                                 # (do NOT on v5e: no bf16 VPU)
    min_grid_steps=4,            # >= 2 grid steps per v7x TensorCore keeps both pipelined
):
    B, C_in, H, W = x.shape
    kh, kw = kernel_size
    K = kh * kw
    C_out = base_w.shape[0]
    GS = grid_size + spline_order
    Gf = (GS + 1) * C_in
    p_h, p_w = padding
    d_h, d_w = dilation
    s_h, s_w = stride

    Hp, Wp = H + 2 * p_h, W + 2 * p_w
    h_out = (Hp - d_h * (kh - 1) - 1) // s_h + 1
    w_out = (Wp - d_w * (kw - 1) - 1) // s_w + 1

    # ---- per-pixel lane-dense layout (C_in, B*Hp*Wp): NO kh*kw im2col duplication ----
    # TODO(synk): fuse this single pad+transpose into the kernel by reading the NCHW slab
    # with memory_space=pl.ANY and a manual DMA (saves one extra HBM pass over the input).
    xp = jnp.pad(x, ((0, 0), (0, 0), (p_h, p_h), (p_w, p_w)))
    Npix = B * Hp * Wp
    Xt = jnp.transpose(xp, (1, 0, 2, 3)).reshape(C_in, Npix).astype(jnp.float32)

    # Conv gather = constant lane offsets on the flattened padded pixel grid.  The kernel
    # computes the stride-1 output everywhere; striding / garbage border columns are
    # sliced away afterwards (the tiny matmul is nowhere near the bottleneck, the VPU
    # spline work is -- and it is now per-pixel, not per-patch).
    offsets = tuple(ki * d_h * Wp + kj * d_w for ki in range(kh) for kj in range(kw))
    halo = max(128, ((max(offsets) + 127) // 128) * 128)

    # ---- lane tiling: big tiles, but keep >= min_grid_steps grid steps ----
    tile_cap = max(128, ((pl.cdiv(Npix, min_grid_steps) + 127) // 128) * 128)
    tn = min(tile_n, tile_cap)
    tn = ((tn + halo - 1) // halo) * halo        # halo block index must divide the tile
    N_pad = ((Npix + tn - 1) // tn) * tn
    Xt = jnp.pad(Xt, ((0, 0), (0, N_pad + halo - Npix)))
    bpt = tn // halo
    grid_n = N_pad // tn

    # ---- weight packing: (K, C_out_pad, Gf), columns = [base(c) | g=0(c) | ... ] ----
    C_out_pad = ((C_out + 7) // 8) * 8           # unmasked sublane stores / full MXU tile
    sw_scaled = spline_w * spline_scaler[..., None]                 # (C_out, C_in, K, GS)
    w_base = jnp.transpose(base_w, (2, 0, 1))                       # (K, C_out, C_in)
    w_spl = jnp.transpose(sw_scaled, (2, 0, 3, 1)).reshape(K, C_out, GS * C_in)
    Wk = jnp.concatenate([w_base, w_spl], axis=-1)                  # (K, C_out, Gf)
    Wk = jnp.pad(Wk, ((0, 0), (0, C_out_pad - C_out), (0, 0))).astype(matmul_dtype)

    # Uniform knot vector (efficient-kan "grid" buffer), baked in as trace-time constants.
    hk = (grid_range[1] - grid_range[0]) / grid_size
    knots = tuple(float(grid_range[0] + (i - spline_order) * hk)
                  for i in range(grid_size + 2 * spline_order + 1))

    kernel = functools.partial(
        _kan_conv_kernel, knots=knots, spline_order=spline_order, offsets=offsets,
        compute_dtype=compute_dtype, mm_dtype=matmul_dtype)

    out_flat = pl.pallas_call(
        kernel,
        out_shape=jax.ShapeDtypeStruct((C_out_pad, N_pad), jnp.float32),
        grid_spec=pltpu.PrefetchScalarGridSpec(
            num_scalar_prefetch=0,
            grid=(grid_n,),
            in_specs=[
                pl.BlockSpec((C_in, tn), lambda i: (0, i)),
                pl.BlockSpec((C_in, halo), lambda i: (0, (i + 1) * bpt)),   # right halo
                pl.BlockSpec((K, C_out_pad, Gf), lambda i: (0, 0, 0)),      # resident W
            ],
            out_specs=pl.BlockSpec((C_out_pad, tn), lambda i: (0, i)),
        ),
        compiler_params=pltpu.CompilerParams(
            dimension_semantics=("parallel",),
            vmem_limit_bytes=32 * 1024 * 1024),   # covers v5e's 16 MiB scoped default
    )(Xt, Xt, Wk)

    out = out_flat[:C_out, :Npix].reshape(C_out, B, Hp, Wp)
    out = out[:, :, :(h_out - 1) * s_h + 1:s_h, :(w_out - 1) * s_w + 1:s_w]
    return jnp.transpose(out, (1, 0, 2, 3))       # NCHW, matches the PyTorch module


def _reference(X, bw_t, sw_t, knots, spline_order):
    """Pure-JAX KANLinear reference on flat (N, F) patches (original, divide-based form)."""
    base = (X * jax.nn.sigmoid(X)) @ bw_t
    bases = [
        jnp.logical_and(X >= knots[g], X < knots[g + 1]).astype(jnp.float32)
        for g in range(len(knots) - 1)
    ]
    for k in range(1, spline_order + 1):
        bases = [
            (X - knots[g]) / (knots[g + k] - knots[g]) * bases[g]
            + (knots[g + k + 1] - X) / (knots[g + k + 1] - knots[g + 1]) * bases[g + 1]
            for g in range(len(bases) - 1)
        ]
    return base + jnp.concatenate(bases, axis=-1) @ sw_t


if __name__ == "__main__":
    # Module config: in_channels=4, out_channels=3, kernel_size=(2,2), stride=(1,1),
    # padding=(0,0), dilation=(1,1), grid_size=5, spline_order=3, SiLU base activation.
    B, C_in, H, W = 2, 4, 16, 16
    C_out = 3
    kernel_size = (2, 2)
    grid_size, spline_order = 5, 3
    K = kernel_size[0] * kernel_size[1]
    GS = grid_size + spline_order

    key = jax.random.PRNGKey(0)
    k1, k2, k3, k4 = jax.random.split(key, 4)
    x = jax.random.normal(k1, (B, C_in, H, W), jnp.float32)
    # Deterministic synthetic parameter init (in_channels*out_channels KANLinear(4 -> 1)).
    base_w = 0.1 * jax.random.normal(k2, (C_out, C_in, K), jnp.float32)
    spline_w = 0.1 * jax.random.normal(k3, (C_out, C_in, K, GS), jnp.float32)
    spline_scaler = 1.0 + 0.1 * jax.random.normal(k4, (C_out, C_in, K), jnp.float32)

    # Default (bf16 matmul) path + f32 matmul path (tight numerical check).
    out_bf16 = jax.block_until_ready(kan_conv2d(
        x, base_w, spline_w, spline_scaler,
        kernel_size=kernel_size, grid_size=grid_size, spline_order=spline_order))
    out_f32 = jax.block_until_ready(kan_conv2d(
        x, base_w, spline_w, spline_scaler,
        kernel_size=kernel_size, grid_size=grid_size, spline_order=spline_order,
        matmul_dtype=jnp.float32))

    h_out, w_out = H - 1, W - 1
    assert out_bf16.shape == (B, C_out, h_out, w_out), out_bf16.shape
    assert out_f32.shape == (B, C_out, h_out, w_out), out_f32.shape

    # Correctness check against a pure-JAX reference of the original math (im2col form).
    cols = []
    for i in range(kernel_size[0]):
        for j in range(kernel_size[1]):
            cols.append(x[:, :, i: i + h_out, j: j + w_out])
    patches = jnp.transpose(jnp.stack(cols, axis=2), (0, 3, 4, 1, 2)).reshape(
        B * h_out * w_out, C_in * K)
    bw_t = base_w.reshape(C_out, C_in * K).T
    sw_t = jnp.transpose(
        (spline_w * spline_scaler[..., None]).reshape(C_out, C_in * K, GS), (2, 1, 0)
    ).reshape(GS * C_in * K, C_out)
    hk = 2.0 / grid_size
    knots = tuple(-1.0 + (i - spline_order) * hk
                  for i in range(grid_size + 2 * spline_order + 1))
    ref = _reference(patches, bw_t, sw_t, knots, spline_order)
    ref = jnp.transpose(ref.reshape(B, h_out, w_out, C_out), (0, 3, 1, 2))

    # f32 path: tight tolerance; bf16 path: re-baselined tolerance (f32 accumulation kept).
    assert jnp.allclose(out_f32, ref, atol=1e-4, rtol=1e-4), \
        float(jnp.max(jnp.abs(out_f32 - ref)))
    assert jnp.allclose(out_bf16, ref, atol=3e-2, rtol=3e-2), \
        float(jnp.max(jnp.abs(out_bf16 - ref)))

    print("KERNEL_OK")
</pallas_src>

<mosaic_0001>
module attributes {stable_mosaic.version = 11 : i64} {
  func.func @_kan_conv_kernel(%arg0: i32, %arg1: memref<4x128xf32, #tpu.memory_space<vmem>>, %arg2: memref<4x128xf32, #tpu.memory_space<vmem>>, %arg3: memref<4x8x36xbf16, #tpu.memory_space<vmem>>, %arg4: memref<8x128xf32, #tpu.memory_space<vmem>>) attributes {dimension_semantics = [#tpu.dimension_semantics<parallel>], iteration_bounds = array<i64: 4>, scalar_prefetch = 0 : i64, scratch_operands = 0 : i64, tpu.core_type = #tpu.core_type<tc>, window_params = [{transform_indices = @transform_0, window_bounds = array<i64: 4, 128>}, {transform_indices = @transform_1, window_bounds = array<i64: 4, 128>}, {pipeline_mode = #tpu.pipeline_mode<synchronous>, transform_indices = @transform_2, window_bounds = array<i64: 4, 8, 36>}, {transform_indices = @transform_3, window_bounds = array<i64: 8, 128>}]} {
    %c0 = arith.constant 0 : index
    %c0_0 = arith.constant 0 : index
    %0 = vector.load %arg1[%c0, %c0_0] : memref<4x128xf32, #tpu.memory_space<vmem>>, vector<4x128xf32>
    %c0_1 = arith.constant 0 : index
    %c0_2 = arith.constant 0 : index
    %1 = vector.load %arg2[%c0_1, %c0_2] : memref<4x128xf32, #tpu.memory_space<vmem>>, vector<4x128xf32>
    %2 = tpu.concatenate %0, %1 in 1 : vector<4x128xf32>, vector<4x128xf32> -> vector<4x256xf32>
    %3 = arith.negf %2 : vector<4x256xf32>
    %4 = math.exp %3 : vector<4x256xf32>
    %cst = arith.constant 1.000000e+00 : f32
    %5 = vector.broadcast %cst : f32 to vector<4x256xf32>
    %6 = arith.addf %5, %4 : vector<4x256xf32>
    %7 = arith.divf %5, %6 : vector<4x256xf32>
    %8 = arith.mulf %2, %7 : vector<4x256xf32>
    %cst_3 = arith.constant -2.200000e+00 : f32
    %9 = vector.broadcast %cst_3 : f32 to vector<4x256xf32>
    %10 = arith.cmpf oge, %2, %9 : vector<4x256xf32>
    %11 = arith.extui %10 : vector<4x256xi1> to vector<4x256xi32>
    %12 = arith.sitofp %11 : vector<4x256xi32> to vector<4x256xf32>
    %cst_4 = arith.constant -1.800000e+00 : f32
    %13 = vector.broadcast %cst_4 : f32 to vector<4x256xf32>
    %14 = arith.cmpf oge, %2, %13 : vector<4x256xf32>
    %15 = arith.extui %14 : vector<4x256xi1> to vector<4x256xi32>
    %16 = arith.sitofp %15 : vector<4x256xi32> to vector<4x256xf32>
    %cst_5 = arith.constant -1.400000e+00 : f32
    %17 = vector.broadcast %cst_5 : f32 to vector<4x256xf32>
    %18 = arith.cmpf oge, %2, %17 : vector<4x256xf32>
    %19 = arith.extui %18 : vector<4x256xi1> to vector<4x256xi32>
    %20 = arith.sitofp %19 : vector<4x256xi32> to vector<4x256xf32>
    %cst_6 = arith.constant -1.000000e+00 : f32
    %21 = vector.broadcast %cst_6 : f32 to vector<4x256xf32>
    %22 = arith.cmpf oge, %2, %21 : vector<4x256xf32>
    %23 = arith.extui %22 : vector<4x256xi1> to vector<4x256xi32>
    %24 = arith.sitofp %23 : vector<4x256xi32> to vector<4x256xf32>
    %cst_7 = arith.constant -6.000000e-01 : f32
    %25 = vector.broadcast %cst_7 : f32 to vector<4x256xf32>
    %26 = arith.cmpf oge, %2, %25 : vector<4x256xf32>
    %27 = arith.extui %26 : vector<4x256xi1> to vector<4x256xi32>
    %28 = arith.sitofp %27 : vector<4x256xi32> to vector<4x256xf32>
    %cst_8 = arith.constant -2.000000e-01 : f32
    %29 = vector.broadcast %cst_8 : f32 to vector<4x256xf32>
    %30 = arith.cmpf oge, %2, %29 : vector<4x256xf32>
    %31 = arith.extui %30 : vector<4x256xi1> to vector<4x256xi32>
    %32 = arith.sitofp %31 : vector<4x256xi32> to vector<4x256xf32>
    %cst_9 = arith.constant 2.000000e-01 : f32
    %33 = vector.broadcast %cst_9 : f32 to vector<4x256xf32>
    %34 = arith.cmpf oge, %2, %33 : vector<4x256xf32>
    %35 = arith.extui %34 : vector<4x256xi1> to vector<4x256xi32>
    %36 = arith.sitofp %35 : vector<4x256xi32> to vector<4x256xf32>
    %cst_10 = arith.constant 6.000000e-01 : f32
    %37 = vector.broadcast %cst_10 : f32 to vector<4x256xf32>
    %38 = arith.cmpf oge, %2, %37 : vector<4x256xf32>
    %39 = arith.extui %38 : vector<4x256xi1> to vector<4x256xi32>
    %40 = arith.sitofp %39 : vector<4x256xi32> to vector<4x256xf32>
    %cst_11 = arith.constant 1.000000e+00 : f32
    %41 = vector.broadcast %cst_11 : f32 to vector<4x256xf32>
    %42 = arith.cmpf oge, %2, %41 : vector<4x256xf32>
    %43 = arith.extui %42 : vector<4x256xi1> to vector<4x256xi32>
    %44 = arith.sitofp %43 : vector<4x256xi32> to vector<4x256xf32>
    %cst_12 = arith.constant 1.400000e+00 : f32
    %45 = vector.broadcast %cst_12 : f32 to vector<4x256xf32>
    %46 = arith.cmpf oge, %2, %45 : vector<4x256xf32>
    %47 = arith.extui %46 : vector<4x256xi1> to vector<4x256xi32>
    %48 = arith.sitofp %47 : vector<4x256xi32> to vector<4x256xf32>
    %cst_13 = arith.constant 1.800000e+00 : f32
    %49 = vector.broadcast %cst_13 : f32 to vector<4x256xf32>
    %50 = arith.cmpf oge, %2, %49 : vector<4x256xf32>
    %51 = arith.extui %50 : vector<4x256xi1> to vector<4x256xi32>
    %52 = arith.sitofp %51 : vector<4x256xi32> to vector<4x256xf32>
    %cst_14 = arith.constant 2.200000e+00 : f32
    %53 = vector.broadcast %cst_14 : f32 to vector<4x256xf32>
    %54 = arith.cmpf oge, %2, %53 : vector<4x256xf32>
    %55 = arith.extui %54 : vector<4x256xi1> to vector<4x256xi32>
    %56 = arith.sitofp %55 : vector<4x256xi32> to vector<4x256xf32>
    %57 = arith.subf %12, %16 : vector<4x256xf32>
    %58 = arith.subf %16, %20 : vector<4x256xf32>
    %59 = arith.subf %20, %24 : vector<4x256xf32>
    %60 = arith.subf %24, %28 : vector<4x256xf32>
    %61 = arith.subf %28, %32 : vector<4x256xf32>
    %62 = arith.subf %32, %36 : vector<4x256xf32>
    %63 = arith.subf %36, %40 : vector<4x256xf32>
    %64 = arith.subf %40, %44 : vector<4x256xf32>
    %65 = arith.subf %44, %48 : vector<4x256xf32>
    %66 = arith.subf %48, %52 : vector<4x256xf32>
    %67 = arith.subf %52, %56 : vector<4x256xf32>
    %cst_15 = arith.constant -2.200000e+00 : f32
    %68 = vector.broadcast %cst_15 : f32 to vector<4x256xf32>
    %69 = arith.subf %2, %68 : vector<4x256xf32>
    %cst_16 = arith.constant 2.500000e+00 : f32
    %70 = vector.broadcast %cst_16 : f32 to vector<4x256xf32>
    %71 = arith.mulf %69, %70 : vector<4x256xf32>
    %cst_17 = arith.constant 0.000000e+00 : f32
    %72 = vector.broadcast %cst_17 : f32 to vector<4x256xf32>
    %73 = arith.subf %71, %72 : vector<4x256xf32>
    %74 = arith.subf %57, %58 : vector<4x256xf32>
    %75 = arith.mulf %73, %74 : vector<4x256xf32>
    %cst_18 = arith.constant 2.000000e+00 : f32
    %76 = vector.broadcast %cst_18 : f32 to vector<4x256xf32>
    %77 = arith.mulf %76, %58 : vector<4x256xf32>
    %78 = arith.addf %75, %77 : vector<4x256xf32>
    %cst_19 = arith.constant 1.000000e+00 : f32
    %79 = vector.broadcast %cst_19 : f32 to vector<4x256xf32>
    %80 = arith.subf %71, %79 : vector<4x256xf32>
    %81 = arith.subf %58, %59 : vector<4x256xf32>
    %82 = arith.mulf %80, %81 : vector<4x256xf32>
    %cst_20 = arith.constant 2.000000e+00 : f32
    %83 = vector.broadcast %cst_20 : f32 to vector<4x256xf32>
    %84 = arith.mulf %83, %59 : vector<4x256xf32>
    %85 = arith.addf %82, %84 : vector<4x256xf32>
    %cst_21 = arith.constant 2.000000e+00 : f32
    %86 = vector.broadcast %cst_21 : f32 to vector<4x256xf32>
    %87 = arith.subf %71, %86 : vector<4x256xf32>
    %88 = arith.subf %59, %60 : vector<4x256xf32>
    %89 = arith.mulf %87, %88 : vector<4x256xf32>
    %cst_22 = arith.constant 2.000000e+00 : f32
    %90 = vector.broadcast %cst_22 : f32 to vector<4x256xf32>
    %91 = arith.mulf %90, %60 : vector<4x256xf32>
    %92 = arith.addf %89, %91 : vector<4x256xf32>
    %cst_23 = arith.constant 3.000000e+00 : f32
    %93 = vector.broadcast %cst_23 : f32 to vector<4x256xf32>
    %94 = arith.subf %71, %93 : vector<4x256xf32>
    %95 = arith.subf %60, %61 : vector<4x256xf32>
    %96 = arith.mulf %94, %95 : vector<4x256xf32>
    %cst_24 = arith.constant 2.000000e+00 : f32
    %97 = vector.broadcast %cst_24 : f32 to vector<4x256xf32>
    %98 = arith.mulf %97, %61 : vector<4x256xf32>
    %99 = arith.addf %96, %98 : vector<4x256xf32>
    %cst_25 = arith.constant 4.000000e+00 : f32
    %100 = vector.broadcast %cst_25 : f32 to vector<4x256xf32>
    %101 = arith.subf %71, %100 : vector<4x256xf32>
    %102 = arith.subf %61, %62 : vector<4x256xf32>
    %103 = arith.mulf %101, %102 : vector<4x256xf32>
    %cst_26 = arith.constant 2.000000e+00 : f32
    %104 = vector.broadcast %cst_26 : f32 to vector<4x256xf32>
    %105 = arith.mulf %104, %62 : vector<4x256xf32>
    %106 = arith.addf %103, %105 : vector<4x256xf32>
    %cst_27 = arith.constant 5.000000e+00 : f32
    %107 = vector.broadcast %cst_27 : f32 to vector<4x256xf32>
    %108 = arith.subf %71, %107 : vector<4x256xf32>
    %109 = arith.subf %62, %63 : vector<4x256xf32>
    %110 = arith.mulf %108, %109 : vector<4x256xf32>
    %cst_28 = arith.constant 2.000000e+00 : f32
    %111 = vector.broadcast %cst_28 : f32 to vector<4x256xf32>
    %112 = arith.mulf %111, %63 : vector<4x256xf32>
    %113 = arith.addf %110, %112 : vector<4x256xf32>
    %cst_29 = arith.constant 6.000000e+00 : f32
    %114 = vector.broadcast %cst_29 : f32 to vector<4x256xf32>
    %115 = arith.subf %71, %114 : vector<4x256xf32>
    %116 = arith.subf %63, %64 : vector<4x256xf32>
    %117 = arith.mulf %115, %116 : vector<4x256xf32>
    %cst_30 = arith.constant 2.000000e+00 : f32
    %118 = vector.broadcast %cst_30 : f32 to vector<4x256xf32>
    %119 = arith.mulf %118, %64 : vector<4x256xf32>
    %120 = arith.addf %117, %119 : vector<4x256xf32>
    %cst_31 = arith.constant 7.000000e+00 : f32
    %121 = vector.broadcast %cst_31 : f32 to vector<4x256xf32>
    %122 = arith.subf %71, %121 : vector<4x256xf32>
    %123 = arith.subf %64, %65 : vector<4x256xf32>
    %124 = arith.mulf %122, %123 : vector<4x256xf32>
    %cst_32 = arith.constant 2.000000e+00 : f32
    %125 = vector.broadcast %cst_32 : f32 to vector<4x256xf32>
    %126 = arith.mulf %125, %65 : vector<4x256xf32>
    %127 = arith.addf %124, %126 : vector<4x256xf32>
    %cst_33 = arith.constant 8.000000e+00 : f32
    %128 = vector.broadcast %cst_33 : f32 to vector<4x256xf32>
    %129 = arith.subf %71, %128 : vector<4x256xf32>
    %130 = arith.subf %65, %66 : vector<4x256xf32>
    %131 = arith.mulf %129, %130 : vector<4x256xf32>
    %cst_34 = arith.constant 2.000000e+00 : f32
    %132 = vector.broadcast %cst_34 : f32 to vector<4x256xf32>
    %133 = arith.mulf %132, %66 : vector<4x256xf32>
    %134 = arith.addf %131, %133 : vector<4x256xf32>
    %cst_35 = arith.constant 9.000000e+00 : f32
    %135 = vector.broadcast %cst_35 : f32 to vector<4x256xf32>
    %136 = arith.subf %71, %135 : vector<4x256xf32>
    %137 = arith.subf %66, %67 : vector<4x256xf32>
    %138 = arith.mulf %136, %137 : vector<4x256xf32>
    %cst_36 = arith.constant 2.000000e+00 : f32
    %139 = vector.broadcast %cst_36 : f32 to vector<4x256xf32>
    %140 = arith.mulf %139, %67 : vector<4x256xf32>
    %141 = arith.addf %138, %140 : vector<4x256xf32>
    %cst_37 = arith.constant -2.200000e+00 : f32
    %142 = vector.broadcast %cst_37 : f32 to vector<4x256xf32>
    %143 = arith.subf %2, %142 : vector<4x256xf32>
    %cst_38 = arith.constant 1.250000e+00 : f32
    %144 = vector.broadcast %cst_38 : f32 to vector<4x256xf32>
    %145 = arith.mulf %143, %144 : vector<4x256xf32>
    %cst_39 = arith.constant 0.000000e+00 : f32
    %146 = vector.broadcast %cst_39 : f32 to vector<4x256xf32>
    %147 = arith.subf %145, %146 : vector<4x256xf32>
    %148 = arith.subf %78, %85 : vector<4x256xf32>
    %149 = arith.mulf %147, %148 : vector<4x256xf32>
    %cst_40 = arith.constant 1.500000e+00 : f32
    %150 = vector.broadcast %cst_40 : f32 to vector<4x256xf32>
    %151 = arith.mulf %150, %85 : vector<4x256xf32>
    %152 = arith.addf %149, %151 : vector<4x256xf32>
    %cst_41 = arith.constant 5.000000e-01 : f32
    %153 = vector.broadcast %cst_41 : f32 to vector<4x256xf32>
    %154 = arith.subf %145, %153 : vector<4x256xf32>
    %155 = arith.subf %85, %92 : vector<4x256xf32>
    %156 = arith.mulf %154, %155 : vector<4x256xf32>
    %cst_42 = arith.constant 1.500000e+00 : f32
    %157 = vector.broadcast %cst_42 : f32 to vector<4x256xf32>
    %158 = arith.mulf %157, %92 : vector<4x256xf32>
    %159 = arith.addf %156, %158 : vector<4x256xf32>
    %cst_43 = arith.constant 1.000000e+00 : f32
    %160 = vector.broadcast %cst_43 : f32 to vector<4x256xf32>
    %161 = arith.subf %145, %160 : vector<4x256xf32>
    %162 = arith.subf %92, %99 : vector<4x256xf32>
    %163 = arith.mulf %161, %162 : vector<4x256xf32>
    %cst_44 = arith.constant 1.500000e+00 : f32
    %164 = vector.broadcast %cst_44 : f32 to vector<4x256xf32>
    %165 = arith.mulf %164, %99 : vector<4x256xf32>
    %166 = arith.addf %163, %165 : vector<4x256xf32>
    %cst_45 = arith.constant 1.500000e+00 : f32
    %167 = vector.broadcast %cst_45 : f32 to vector<4x256xf32>
    %168 = arith.subf %145, %167 : vector<4x256xf32>
    %169 = arith.subf %99, %106 : vector<4x256xf32>
    %170 = arith.mulf %168, %169 : vector<4x256xf32>
    %cst_46 = arith.constant 1.500000e+00 : f32
    %171 = vector.broadcast %cst_46 : f32 to vector<4x256xf32>
    %172 = arith.mulf %171, %106 : vector<4x256xf32>
    %173 = arith.addf %170, %172 : vector<4x256xf32>
    %cst_47 = arith.constant 2.000000e+00 : f32
    %174 = vector.broadcast %cst_47 : f32 to vector<4x256xf32>
    %175 = arith.subf %145, %174 : vector<4x256xf32>
    %176 = arith.subf %106, %113 : vector<4x256xf32>
    %177 = arith.mulf %175, %176 : vector<4x256xf32>
    %cst_48 = arith.constant 1.500000e+00 : f32
    %178 = vector.broadcast %cst_48 : f32 to vector<4x256xf32>
    %179 = arith.mulf %178, %113 : vector<4x256xf32>
    %180 = arith.addf %177, %179 : vector<4x256xf32>
    %cst_49 = arith.constant 2.500000e+00 : f32
    %181 = vector.broadcast %cst_49 : f32 to vector<4x256xf32>
    %182 = arith.subf %145, %181 : vector<4x256xf32>
    %183 = arith.subf %113, %120 : vector<4x256xf32>
    %184 = arith.mulf %182, %183 : vector<4x256xf32>
    %cst_50 = arith.constant 1.500000e+00 : f32
    %185 = vector.broadcast %cst_50 : f32 to vector<4x256xf32>
    %186 = arith.mulf %185, %120 : vector<4x256xf32>
    %187 = arith.addf %184, %186 : vector<4x256xf32>
    %cst_51 = arith.constant 3.000000e+00 : f32
    %188 = vector.broadcast %cst_51 : f32 to vector<4x256xf32>
    %189 = arith.subf %145, %188 : vector<4x256xf32>
    %190 = arith.subf %120, %127 : vector<4x256xf32>
    %191 = arith.mulf %189, %190 : vector<4x256xf32>
    %cst_52 = arith.constant 1.500000e+00 : f32
    %192 = vector.broadcast %cst_52 : f32 to vector<4x256xf32>
    %193 = arith.mulf %192, %127 : vector<4x256xf32>
    %194 = arith.addf %191, %193 : vector<4x256xf32>
    %cst_53 = arith.constant 3.500000e+00 : f32
    %195 = vector.broadcast %cst_53 : f32 to vector<4x256xf32>
    %196 = arith.subf %145, %195 : vector<4x256xf32>
    %197 = arith.subf %127, %134 : vector<4x256xf32>
    %198 = arith.mulf %196, %197 : vector<4x256xf32>
    %cst_54 = arith.constant 1.500000e+00 : f32
    %199 = vector.broadcast %cst_54 : f32 to vector<4x256xf32>
    %200 = arith.mulf %199, %134 : vector<4x256xf32>
    %201 = arith.addf %198, %200 : vector<4x256xf32>
    %cst_55 = arith.constant 4.000000e+00 : f32
    %202 = vector.broadcast %cst_55 : f32 to vector<4x256xf32>
    %203 = arith.subf %145, %202 : vector<4x256xf32>
    %204 = arith.subf %134, %141 : vector<4x256xf32>
    %205 = arith.mulf %203, %204 : vector<4x256xf32>
    %cst_56 = arith.constant 1.500000e+00 : f32
    %206 = vector.broadcast %cst_56 : f32 to vector<4x256xf32>
    %207 = arith.mulf %206, %141 : vector<4x256xf32>
    %208 = arith.addf %205, %207 : vector<4x256xf32>
    %cst_57 = arith.constant -2.200000e+00 : f32
    %209 = vector.broadcast %cst_57 : f32 to vector<4x256xf32>
    %210 = arith.subf %2, %209 : vector<4x256xf32>
    %cst_58 = arith.constant 0.833333313 : f32
    %211 = vector.broadcast %cst_58 : f32 to vector<4x256xf32>
    %212 = arith.mulf %210, %211 : vector<4x256xf32>
    %cst_59 = arith.constant 0.000000e+00 : f32
    %213 = vector.broadcast %cst_59 : f32 to vector<4x256xf32>
    %214 = arith.subf %212, %213 : vector<4x256xf32>
    %215 = arith.subf %152, %159 : vector<4x256xf32>
    %216 = arith.mulf %214, %215 : vector<4x256xf32>
    %cst_60 = arith.constant 1.33333337 : f32
    %217 = vector.broadcast %cst_60 : f32 to vector<4x256xf32>
    %218 = arith.mulf %217, %159 : vector<4x256xf32>
    %219 = arith.addf %216, %218 : vector<4x256xf32>
    %cst_61 = arith.constant 0.333333343 : f32
    %220 = vector.broadcast %cst_61 : f32 to vector<4x256xf32>
    %221 = arith.subf %212, %220 : vector<4x256xf32>
    %222 = arith.subf %159, %166 : vector<4x256xf32>
    %223 = arith.mulf %221, %222 : vector<4x256xf32>
    %cst_62 = arith.constant 1.33333337 : f32
    %224 = vector.broadcast %cst_62 : f32 to vector<4x256xf32>
    %225 = arith.mulf %224, %166 : vector<4x256xf32>
    %226 = arith.addf %223, %225 : vector<4x256xf32>
    %cst_63 = arith.constant 0.666666686 : f32
    %227 = vector.broadcast %cst_63 : f32 to vector<4x256xf32>
    %228 = arith.subf %212, %227 : vector<4x256xf32>
    %229 = arith.subf %166, %173 : vector<4x256xf32>
    %230 = arith.mulf %228, %229 : vector<4x256xf32>
    %cst_64 = arith.constant 1.33333337 : f32
    %231 = vector.broadcast %cst_64 : f32 to vector<4x256xf32>
    %232 = arith.mulf %231, %173 : vector<4x256xf32>
    %233 = arith.addf %230, %232 : vector<4x256xf32>
    %cst_65 = arith.constant 1.000000e+00 : f32
    %234 = vector.broadcast %cst_65 : f32 to vector<4x256xf32>
    %235 = arith.subf %212, %234 : vector<4x256xf32>
    %236 = arith.subf %173, %180 : vector<4x256xf32>
    %237 = arith.mulf %235, %236 : vector<4x256xf32>
    %cst_66 = arith.constant 1.33333337 : f32
    %238 = vector.broadcast %cst_66 : f32 to vector<4x256xf32>
    %239 = arith.mulf %238, %180 : vector<4x256xf32>
    %240 = arith.addf %237, %239 : vector<4x256xf32>
    %cst_67 = arith.constant 1.33333337 : f32
    %241 = vector.broadcast %cst_67 : f32 to vector<4x256xf32>
    %242 = arith.subf %212, %241 : vector<4x256xf32>
    %243 = arith.subf %180, %187 : vector<4x256xf32>
    %244 = arith.mulf %242, %243 : vector<4x256xf32>
    %cst_68 = arith.constant 1.33333337 : f32
    %245 = vector.broadcast %cst_68 : f32 to vector<4x256xf32>
    %246 = arith.mulf %245, %187 : vector<4x256xf32>
    %247 = arith.addf %244, %246 : vector<4x256xf32>
    %cst_69 = arith.constant 1.66666663 : f32
    %248 = vector.broadcast %cst_69 : f32 to vector<4x256xf32>
    %249 = arith.subf %212, %248 : vector<4x256xf32>
    %250 = arith.subf %187, %194 : vector<4x256xf32>
    %251 = arith.mulf %249, %250 : vector<4x256xf32>
    %cst_70 = arith.constant 1.33333337 : f32
    %252 = vector.broadcast %cst_70 : f32 to vector<4x256xf32>
    %253 = arith.mulf %252, %194 : vector<4x256xf32>
    %254 = arith.addf %251, %253 : vector<4x256xf32>
    %cst_71 = arith.constant 2.000000e+00 : f32
    %255 = vector.broadcast %cst_71 : f32 to vector<4x256xf32>
    %256 = arith.subf %212, %255 : vector<4x256xf32>
    %257 = arith.subf %194, %201 : vector<4x256xf32>
    %258 = arith.mulf %256, %257 : vector<4x256xf32>
    %cst_72 = arith.constant 1.33333337 : f32
    %259 = vector.broadcast %cst_72 : f32 to vector<4x256xf32>
    %260 = arith.mulf %259, %201 : vector<4x256xf32>
    %261 = arith.addf %258, %260 : vector<4x256xf32>
    %cst_73 = arith.constant 2.33333325 : f32
    %262 = vector.broadcast %cst_73 : f32 to vector<4x256xf32>
    %263 = arith.subf %212, %262 : vector<4x256xf32>
    %264 = arith.subf %201, %208 : vector<4x256xf32>
    %265 = arith.mulf %263, %264 : vector<4x256xf32>
    %cst_74 = arith.constant 1.33333337 : f32
    %266 = vector.broadcast %cst_74 : f32 to vector<4x256xf32>
    %267 = arith.mulf %266, %208 : vector<4x256xf32>
    %268 = arith.addf %265, %267 : vector<4x256xf32>
    %269 = arith.truncf %8 : vector<4x256xf32> to vector<4x256xbf16>
    %270 = arith.truncf %219 : vector<4x256xf32> to vector<4x256xbf16>
    %271 = arith.truncf %226 : vector<4x256xf32> to vector<4x256xbf16>
    %272 = arith.truncf %233 : vector<4x256xf32> to vector<4x256xbf16>
    %273 = arith.truncf %240 : vector<4x256xf32> to vector<4x256xbf16>
    %274 = arith.truncf %247 : vector<4x256xf32> to vector<4x256xbf16>
    %275 = arith.truncf %254 : vector<4x256xf32> to vector<4x256xbf16>
    %276 = arith.truncf %261 : vector<4x256xf32> to vector<4x256xbf16>
    %277 = arith.truncf %268 : vector<4x256xf32> to vector<4x256xbf16>
    %278 = tpu.concatenate %269, %270, %271, %272, %273, %274, %275, %276, %277 in 0 : vector<4x256xbf16>, vector<4x256xbf16>, vector<4x256xbf16>, vector<4x256xbf16>, vector<4x256xbf16>, vector<4x256xbf16>, vector<4x256xbf16>, vector<4x256xbf16>, vector<4x256xbf16> -> vector<36x256xbf16>
    %cst_75 = arith.constant 0.000000e+00 : f32
    %279 = vector.broadcast %cst_75 : f32 to vector<8x128xf32>
    %c0_76 = arith.constant 0 : index
    %c0_77 = arith.constant 0 : index
    %c0_78 = arith.constant 0 : index
    %280 = vector.load %arg3[%c0_76, %c0_77, %c0_78] : memref<4x8x36xbf16, #tpu.memory_space<vmem>>, vector<1x8x36xbf16>
    %281 = vector.shape_cast %280 : vector<1x8x36xbf16> to vector<8x36xbf16>
    %282 = vector.extract_strided_slice %278 {offsets = [0, 0], sizes = [36, 128], strides = [1, 1]} : vector<36x256xbf16> to vector<36x128xbf16>
    %cst_79 = arith.constant dense<0.000000e+00> : vector<8x128xf32>
    %283 = tpu.matmul %281, %282, %cst_79 {dimension_numbers = #tpu.dot_dimension_numbers<[1], [0], [0], [1], [0, 0, 1, 1], [], []>} : vector<8x36xbf16>, vector<36x128xbf16>, vector<8x128xf32> -> vector<8x128xf32>
    %284 = arith.addf %279, %283 : vector<8x128xf32>
    %c1 = arith.constant 1 : index
    %c0_80 = arith.constant 0 : index
    %c0_81 = arith.constant 0 : index
    %285 = vector.load %arg3[%c1, %c0_80, %c0_81] : memref<4x8x36xbf16, #tpu.memory_space<vmem>>, vector<1x8x36xbf16>
    %286 = vector.shape_cast %285 : vector<1x8x36xbf16> to vector<8x36xbf16>
    %287 = vector.extract_strided_slice %278 {offsets = [0, 1], sizes = [36, 128], strides = [1, 1]} : vector<36x256xbf16> to vector<36x128xbf16>
    %cst_82 = arith.constant dense<0.000000e+00> : vector<8x128xf32>
    %288 = tpu.matmul %286, %287, %cst_82 {dimension_numbers = #tpu.dot_dimension_numbers<[1], [0], [0], [1], [0, 0, 1, 1], [], []>} : vector<8x36xbf16>, vector<36x128xbf16>, vector<8x128xf32> -> vector<8x128xf32>
    %289 = arith.addf %284, %288 : vector<8x128xf32>
    %c2 = arith.constant 2 : index
    %c0_83 = arith.constant 0 : index
    %c0_84 = arith.constant 0 : index
    %290 = vector.load %arg3[%c2, %c0_83, %c0_84] : memref<4x8x36xbf16, #tpu.memory_space<vmem>>, vector<1x8x36xbf16>
    %291 = vector.shape_cast %290 : vector<1x8x36xbf16> to vector<8x36xbf16>
    %292 = vector.extract_strided_slice %278 {offsets = [0, 16], sizes = [36, 128], strides = [1, 1]} : vector<36x256xbf16> to vector<36x128xbf16>
    %cst_85 = arith.constant dense<0.000000e+00> : vector<8x128xf32>
    %293 = tpu.matmul %291, %292, %cst_85 {dimension_numbers = #tpu.dot_dimension_numbers<[1], [0], [0], [1], [0, 0, 1, 1], [], []>} : vector<8x36xbf16>, vector<36x128xbf16>, vector<8x128xf32> -> vector<8x128xf32>
    %294 = arith.addf %289, %293 : vector<8x128xf32>
    %c3 = arith.constant 3 : index
    %c0_86 = arith.constant 0 : index
    %c0_87 = arith.constant 0 : index
    %295 = vector.load %arg3[%c3, %c0_86, %c0_87] : memref<4x8x36xbf16, #tpu.memory_space<vmem>>, vector<1x8x36xbf16>
    %296 = vector.shape_cast %295 : vector<1x8x36xbf16> to vector<8x36xbf16>
    %297 = vector.extract_strided_slice %278 {offsets = [0, 17], sizes = [36, 128], strides = [1, 1]} : vector<36x256xbf16> to vector<36x128xbf16>
    %cst_88 = arith.constant dense<0.000000e+00> : vector<8x128xf32>
    %298 = tpu.matmul %296, %297, %cst_88 {dimension_numbers = #tpu.dot_dimension_numbers<[1], [0], [0], [1], [0, 0, 1, 1], [], []>} : vector<8x36xbf16>, vector<36x128xbf16>, vector<8x128xf32> -> vector<8x128xf32>
    %299 = arith.addf %294, %298 : vector<8x128xf32>
    %c0_89 = arith.constant 0 : index
    %c0_90 = arith.constant 0 : index
    %300 = vector.load %arg4[%c0_89, %c0_90] : memref<8x128xf32, #tpu.memory_space<vmem>>, vector<8x128xf32>
    tpu.vector_store %arg4[%c0_89, %c0_90], %299 {strides = array<i32>} : memref<8x128xf32, #tpu.memory_space<vmem>>, vector<8x128xf32>,
    return
  }
  func.func @transform_0(%arg0: i32) -> (i32, i32) {
    %c0_i32 = arith.constant 0 : i32
    %c0_i32_0 = arith.constant 0 : i32
    return %c0_i32, %arg0 : i32, i32
  }
  func.func @transform_1(%arg0: i32) -> (i32, i32) {
    %c1_i32 = arith.constant 1 : i32
    %0 = arith.addi %arg0, %c1_i32 : i32
    %c1_i32_0 = arith.constant 1 : i32
    %1 = arith.muli %0, %c1_i32_0 : i32
    %c0_i32 = arith.constant 0 : i32
    %c0_i32_1 = arith.constant 0 : i32
    return %c0_i32, %1 : i32, i32
  }
  func.func @transform_2(%arg0: i32) -> (i32, i32, i32) {
    %c0_i32 = arith.constant 0 : i32
    %c0_i32_0 = arith.constant 0 : i32
    %c0_i32_1 = arith.constant 0 : i32
    %c0_i32_2 = arith.constant 0 : i32
    return %c0_i32, %c0_i32_0, %c0_i32_1 : i32, i32, i32
  }
  func.func @transform_3(%arg0: i32) -> (i32, i32) {
    %c0_i32 = arith.constant 0 : i32
    %c0_i32_0 = arith.constant 0 : i32
    return %c0_i32, %arg0 : i32, i32
  }
}

</mosaic_0001>

<llo_original>
// kernel: tpu_custom_call.1
$region0: #{tpu_custom_call.1}
  #allocation0 [shape = 'u32[]', space=smem, size = 0x4, offset = 0x4, fixed_abs, tag = 'smem constant byte address 0x4 - core index']
  #allocation1 [shape = 'u32[144,128]{1,0:T(1,128)}', space=vmem, size = 0x12000, scoped, tag = 'internal scratch']
  %s0 = inlined_call_operand.hbm [shape: f32[4,640], index: 0, kind: input, shape index: {}]
  %s1 = inlined_call_operand.hbm [shape: f32[4,640], index: 1, kind: input, shape index: {}]
  %s2 = inlined_call_operand.hbm [shape: bf16[4,8,36], index: 2, kind: input, shape index: {}]
  %s3 = inlined_call_operand.hbm [shape: f32[8,512], index: 3, kind: output, shape index: {}]
  %s4 = sld [smem:[#allocation0]]
  $region57: #{tpu_custom_call.1} parent=0
    _
  %s6 = ssub.s32 1, %s4
  %s7 = scalar_select 0, %s6, %s4
  $region1: #{tpu_custom_call.1} parent=0
    #allocation2 [shape = 'u8[4096]{0}', space=vmem, size = 0x1000, scoped, tag = 'input window, operand 0']
    #allocation3 [shape = 's32[2]{0}', space=sflag, size = 0x8, scoped, tag = 'scoped memory for tpu_custom_call.1']
    #allocation4 [shape = 's32[2]{0}', space=sflag, size = 0x8, scoped, tag = 'scoped memory for tpu_custom_call.1']
    #allocation5 [shape = 'u8[4096]{0}', space=vmem, size = 0x1000, scoped, tag = 'input window, operand 1']
    #allocation6 [shape = 's32[2]{0}', space=sflag, size = 0x8, scoped, tag = 'scoped memory for tpu_custom_call.1']
    #allocation7 [shape = 'u8[8192]{0}', space=vmem, size = 0x2000, scoped, tag = 'input window, operand 2, single buffered']
    #allocation8 [shape = 'u8[8192]{0}', space=vmem, size = 0x2000, scoped, tag = 'output window, operand 0']
    %8 = vsyncpa [#allocation3], 0
    %s9 = scalar_lea.sflag [#allocation3], 1
    %10 = vsyncpa %s9, 0
    %11 = vsyncpa [#allocation6], 0
    %s12 = scalar_lea.sflag [#allocation6], 1
    %13 = vsyncpa %s12, 0
    %14 = vsyncpa [#allocation4], 0
    %s15 = scalar_lea.sflag [#allocation4], 1
    %16 = vsyncpa %s15, 0
    loop: start=0, step=1, limit=6
    $region2: #{tpu_custom_call.1} parent=1 // loop_pre_header
      _
    $region3: #{tpu_custom_call.1} parent=1 // loop_header
      %s18 = sphi 0, %s22
      %p19 = scmp.ge.s32.totalorder %s18, 6
      %s28 = sphi 0, %s30
      %s31 = sphi 0, %s28
      %s32 = sphi 0, %s31
      %s48 = sphi 0, %s32
      %s56 = sphi 0, %s58
      %s59 = sphi 0, %s56
      %s60 = sphi 0, %s59
      %s76 = sphi 0, %s60
      %s80 = sphi 0, %s80
      %s82 = sphi 0, %s80
      %s83 = sphi 0, %s82
      %s97 = sphi 0, %s83
      %s103 = sphi 0, %s105
      %s106 = sphi 0, %s103
      %s107 = sphi 0, %s106
      %s123 = sphi 0, %s107
    $region4: #{tpu_custom_call.1} parent=1 // loop_header_branch
      %21 = sbr.rel (%p19) target = $region8
    $region5: #{tpu_custom_call.1} parent=1 // loop_body
      %s23 = ssub.s32 %s18, 1
      %s24 = ssub.s32 %s18, 2
      %s25 = sadd.s32 %s18, 1
      %s26 = ssub.s32 %s18, %s25
      %p27 = scmp.eq.s32.totalorder %s26, 0
      %s29 = sadd.s32 %s28, 1
      %s30 = scalar_select %p27, %s28, %s29
      %p33 = pneg %p27
      %p34 = scmp.eq.s32.totalorder %s18, 3
      %p35 = por %p33, %p34
      %p36 = scmp.ne.s32.totalorder %s28, %s31
      %p37 = scmp.eq.s32.totalorder %s18, 0
      %p38 = por %p36, %p37
      %p39 = scmp.ne.s32.totalorder %s28, %s31
      %p40 = scmp.eq.s32.totalorder %s23, 3
      %p41 = por %p39, %p40
      %p42 = scmp.ne.s32.totalorder %s31, %s32
      %p43 = scmp.eq.s32.totalorder %s23, 0
      %p44 = por %p42, %p43
      %p45 = scmp.ne.s32.totalorder %s31, %s32
      %p46 = scmp.eq.s32.totalorder %s24, 3
      %p47 = por %p45, %p46
      %p49 = scmp.ne.s32.totalorder %s32, %s48
      %p50 = scmp.eq.s32.totalorder %s24, 0
      %p51 = por %p49, %p50
      %s52 = sadd.s32 %s18, 1
      %s53 = sadd.s32 %s25, 1
      %s54 = ssub.s32 %s52, %s53
      %p55 = scmp.eq.s32.totalorder %s54, 0
      %s57 = sadd.s32 %s56, 1
      %s58 = scalar_select %p55, %s56, %s57
      %p61 = pneg %p55
      %p62 = scmp.eq.s32.totalorder %s18, 3
      %p63 = por %p61, %p62
      %p64 = scmp.ne.s32.totalorder %s56, %s59
      %p65 = scmp.eq.s32.totalorder %s18, 0
      %p66 = por %p64, %p65
      %p67 = scmp.ne.s32.totalorder %s56, %s59
      %p68 = scmp.eq.s32.totalorder %s23, 3
      %p69 = por %p67, %p68
      %p70 = scmp.ne.s32.totalorder %s59, %s60
      %p71 = scmp.eq.s32.totalorder %s23, 0
      %p72 = por %p70, %p71
      %p73 = scmp.ne.s32.totalorder %s59, %s60
      %p74 = scmp.eq.s32.totalorder %s24, 3
      %p75 = por %p73, %p74
      %p77 = scmp.ne.s32.totalorder %s60, %s76
      %p78 = scmp.eq.s32.totalorder %s24, 0
      %p79 = por %p77, %p78
      %s81 = sadd.s32 %s80, 1
      %p84 = scmp.eq.s32.totalorder %s18, 3
      %p85 = scmp.ne.s32.totalorder %s80, %s82
      %p86 = scmp.eq.s32.totalorder %s18, 0
      %p87 = por %p85, %p86
      %p88 = scmp.ne.s32.totalorder %s80, %s82
      %p89 = scmp.eq.s32.totalorder %s23, 3
      %p90 = por %p88, %p89
      %p91 = scmp.ne.s32.totalorder %s82, %s83
      %p92 = scmp.eq.s32.totalorder %s23, 0
      %p93 = por %p91, %p92
      %p94 = scmp.ne.s32.totalorder %s82, %s83
      %p95 = scmp.eq.s32.totalorder %s24, 3
      %p96 = por %p94, %p95
      %p98 = scmp.ne.s32.totalorder %s83, %s97
      %p99 = scmp.eq.s32.totalorder %s24, 0
      %p100 = por %p98, %p99
      %s101 = ssub.s32 %s18, %s25
      %p102 = scmp.eq.s32.totalorder %s101, 0
      %s104 = sadd.s32 %s103, 1
      %s105 = scalar_select %p102, %s103, %s104
      %p108 = pneg %p102
      %p109 = scmp.eq.s32.totalorder %s18, 3
      %p110 = por %p108, %p109
      %p111 = scmp.ne.s32.totalorder %s103, %s106
      %p112 = scmp.eq.s32.totalorder %s18, 0
      %p113 = por %p111, %p112
      %p114 = scmp.ne.s32.totalorder %s103, %s106
      %p115 = scmp.eq.s32.totalorder %s23, 3
      %p116 = por %p114, %p115
      %p117 = scmp.ne.s32.totalorder %s106, %s107
      %p118 = scmp.eq.s32.totalorder %s23, 0
      %p119 = por %p117, %p118
      %p120 = scmp.ne.s32.totalorder %s106, %s107
      %p121 = scmp.eq.s32.totalorder %s24, 3
      %p122 = por %p120, %p121
      %p124 = scmp.ne.s32.totalorder %s107, %s123
      %p125 = scmp.eq.s32.totalorder %s24, 0
      %p126 = por %p124, %p125
      %p127 = scmp.le.s32.totalorder 1, %s18
      %p128 = scmp.lt.s32.totalorder %s18, 5
      %p129 = pnand %p127, %p128
      %p130 = pneg %p129
      // Predicated region
      $region9: #{tpu_custom_call.1} parent=5 // pred_check
        _
      $region10: #{tpu_custom_call.1} parent=5 // pred_check_branch
        %132 = sbr.rel (%p129) target = $region12
      $region11: #{tpu_custom_call.1} parent=5 // pred_region
        %s133 = ssub.s32 %s18, 1
        // Predicated region
        $region13: #{tpu_custom_call.1} parent=11 // pred_check
          %p134 = pneg %p93
        $region14: #{tpu_custom_call.1} parent=11 // pred_check_branch
          %136 = sbr.rel (%p134) target = $region16
        $region15: #{tpu_custom_call.1} parent=11 // pred_region
          %s138 = ssub.s32 256, 256
          %139 = vsyncadd [#allocation6], %s138
          %s140 = sshll.u32 [#allocation7], 4
          %s141 = int_to_ptr.vmem [resolvable:$true] %s140
          %146 = dma.hbm_to_vmem [thread:$0]  %s2, 256, %s141, [#allocation6], 64, 64, 4
        $region16: #{tpu_custom_call.1} parent=11 // pred_fallthru
          _
      $region12: #{tpu_custom_call.1} parent=5 // pred_fallthru
        _
      %p147 = scmp.lt.s32.totalorder %s18, 4
      // Predicated region
      $region17: #{tpu_custom_call.1} parent=5 // pred_check
        %p148 = pneg %p147
      $region18: #{tpu_custom_call.1} parent=5 // pred_check_branch
        %150 = sbr.rel (%p148) target = $region20
      $region19: #{tpu_custom_call.1} parent=5 // pred_region
        // Predicated region
        $region21: #{tpu_custom_call.1} parent=19 // pred_check
          %p151 = pneg %p38
        $region22: #{tpu_custom_call.1} parent=19 // pred_check_branch
          %153 = sbr.rel (%p151) target = $region24
        $region23: #{tpu_custom_call.1} parent=19 // pred_region
          %s154 = sand.u32 %s28, 1
          %s155 = scalar_lea.sflag [#allocation3], %s154
          %s156 = sand.u32 %s28, 1
          %s157 = smul.addr %s156, 4
          %s158 = scalar_lea.vmem [#allocation2], %s157
          %s160 = ssub.s32 64, 64
          %161 = vsyncadd %s155, %s160
          %s162 = smul.addr %s18, 64
          %s163 = scalar_lea.hbm %s0, %s162
          %s165 = sshll.u32 %s158, 4
          %s166 = int_to_ptr.vmem [resolvable:$true] %s165
          %168 = dma.hbm_to_vmem [thread:$0]  %s163, 64, %s166, %s155
        $region24: #{tpu_custom_call.1} parent=19 // pred_fallthru
          _
        // Predicated region
        $region25: #{tpu_custom_call.1} parent=19 // pred_check
          %p169 = pneg %p66
        $region26: #{tpu_custom_call.1} parent=19 // pred_check_branch
          %171 = sbr.rel (%p169) target = $region28
        $region27: #{tpu_custom_call.1} parent=19 // pred_region
          %s172 = sand.u32 %s18, 1
          %s173 = scalar_lea.sflag [#allocation6], %s172
          %s174 = sand.u32 %s56, 1
          %s175 = smul.addr %s174, 4
          %s176 = scalar_lea.vmem [#allocation5], %s175
          %s177 = sadd.s32 %s18, 1
          %s179 = ssub.s32 64, 64
          %180 = vsyncadd %s173, %s179
          %s181 = smul.addr %s177, 64
          %s182 = scalar_lea.hbm %s1, %s181
          %s184 = sshll.u32 %s176, 4
          %s185 = int_to_ptr.vmem [resolvable:$true] %s184
          %187 = dma.hbm_to_vmem [thread:$0]  %s182, 64, %s185, %s173
        $region28: #{tpu_custom_call.1} parent=19 // pred_fallthru
          _
      $region20: #{tpu_custom_call.1} parent=5 // pred_fallthru
        _
      %p188 = scmp.le.s32.totalorder 1, %s18
      %p189 = scmp.lt.s32.totalorder %s18, 5
      %p190 = pnand %p188, %p189
      %p191 = pneg %p190
      // Predicated region
      $region29: #{tpu_custom_call.1} parent=5 // pred_check
        _
      $region30: #{tpu_custom_call.1} parent=5 // pred_check_branch
        %193 = sbr.rel (%p190) target = $region32
      $region31: #{tpu_custom_call.1} parent=5 // pred_region
        %s194 = ssub.s32 %s18, 1
        %s195 = sand.u32 %s31, 1
        %s196 = scalar_lea.sflag [#allocation3], %s195
        %s197 = sand.u32 %s31, 1
        %s198 = smul.addr %s197, 4
        %s199 = scalar_lea.vmem [#allocation2], %s198
        // Predicated region
        $region33: #{tpu_custom_call.1} parent=31 // pred_check
          %p200 = pneg %p44
        $region34: #{tpu_custom_call.1} parent=31 // pred_check_branch
          %202 = sbr.rel (%p200) target = $region36
        $region35: #{tpu_custom_call.1} parent=31 // pred_region
          %203 = dma.done %s196, 64
        $region36: #{tpu_custom_call.1} parent=31 // pred_fallthru
          _
        %s204 = sand.u32 %s23, 1
        %s205 = scalar_lea.sflag [#allocation6], %s204
        %s206 = sand.u32 %s59, 1
        %s207 = smul.addr %s206, 4
        %s208 = scalar_lea.vmem [#allocation5], %s207
        // Predicated region
        $region37: #{tpu_custom_call.1} parent=31 // pred_check
          %p209 = pneg %p72
        $region38: #{tpu_custom_call.1} parent=31 // pred_check_branch
          %211 = sbr.rel (%p209) target = $region40
        $region39: #{tpu_custom_call.1} parent=31 // pred_region
          %212 = dma.done %s205, 64
        $region40: #{tpu_custom_call.1} parent=31 // pred_fallthru
          _
        // Predicated region
        $region41: #{tpu_custom_call.1} parent=31 // pred_check
          %p213 = pneg %p93
        $region42: #{tpu_custom_call.1} parent=31 // pred_check_branch
          %215 = sbr.rel (%p213) target = $region44
        $region43: #{tpu_custom_call.1} parent=31 // pred_region
          %216 = dma.done [#allocation6], 256
        $region44: #{tpu_custom_call.1} parent=31 // pred_fallthru
          _
        %s217 = sand.u32 %s31, 1
        %s218 = scalar_lea.sflag [#allocation3], %s217
        %s219 = sand.u32 %s31, 1
        %s220 = smul.addr %s219, 4
        %s221 = scalar_lea.vmem [#allocation2], %s220
        %p222 = pneg %p44
        %p223 = pneg %p41
        %s224 = sand.u32 %s23, 1
        %s225 = scalar_lea.sflag [#allocation6], %s224
        %s226 = sand.u32 %s59, 1
        %s227 = smul.addr %s226, 4
        %s228 = scalar_lea.vmem [#allocation5], %s227
        %p229 = pneg %p72
        %p230 = pneg %p69
        %p231 = pneg %p93
        %p232 = pneg %p90
        %p233 = pneg %p119
        %p234 = pneg %p116
        %s235 = sand.u32 %s106, 1
        %s236 = scalar_lea.sflag [#allocation4], %s235
        %s237 = sand.u32 %s106, 1
        %s238 = smul.addr %s237, 8
        %s239 = scalar_lea.vmem [#allocation8], %s238
        %s240 = sadd.s32 %s23, 1
        %v242 = vld [vmem:[%s199] sm:$0xf]
        %v243 = vld [vmem:[%s208] sm:$0xf]
        %v244 = vxor.u32 %v242, 2147483648
        %v245 = vxor.u32 %v243, 2147483648
        %v246 = vmul.f32 %v244, 1.442695
        %v247 = vpow.pop %v246
        %v248 = vmul.f32 %v245, 1.442695
        %v249 = vpow.pop %v248
        %v250 = vadd.f32 %v247, 1.0
        %v251 = vadd.f32 %v249, 1.0
        %v252 = vrcp.pop %v250
        %v253 = vmul.f32 1.0, %v252
        %v254 = vrcp.pop %v251
        %v255 = vmul.f32 1.0, %v254
        %v256 = vmul.f32 %v242, %v253
        %v257 = vmul.f32 %v243, %v255
        %vm258 = vcmp.ge.f32.partialorder %v242, -2.2
        %vm259 = vcmp.ge.f32.partialorder %v243, -2.2
        %v260 = vsel %vm258, 1, 0
        %v261 = vsel %vm259, 1, 0
        %v262 = vcvt.s32.f32 %v260
        %v263 = vcvt.s32.f32 %v261
        %vm264 = vcmp.ge.f32.partialorder %v242, -1.8
        %vm265 = vcmp.ge.f32.partialorder %v243, -1.8
        %v266 = vsel %vm264, 1, 0
        %v267 = vsel %vm265, 1, 0
        %v268 = vcvt.s32.f32 %v266
        %v269 = vcvt.s32.f32 %v267
        %vm270 = vcmp.ge.f32.partialorder %v242, -1.4
        %vm271 = vcmp.ge.f32.partialorder %v243, -1.4
        %v272 = vsel %vm270, 1, 0
        %v273 = vsel %vm271, 1, 0
        %v274 = vcvt.s32.f32 %v272
        %v275 = vcvt.s32.f32 %v273
        %vm276 = vcmp.ge.f32.partialorder %v242, -1.0
        %vm277 = vcmp.ge.f32.partialorder %v243, -1.0
        %v278 = vsel %vm276, 1, 0
        %v279 = vsel %vm277, 1, 0
        %v280 = vcvt.s32.f32 %v278
        %v281 = vcvt.s32.f32 %v279
        %vm282 = vcmp.ge.f32.partialorder %v242, -0.6
        %vm283 = vcmp.ge.f32.partialorder %v243, -0.6
        %v284 = vsel %vm282, 1, 0
        %v285 = vsel %vm283, 1, 0
        %v286 = vcvt.s32.f32 %v284
        %v287 = vcvt.s32.f32 %v285
        %vm288 = vcmp.ge.f32.partialorder %v242, -0.2
        %vm289 = vcmp.ge.f32.partialorder %v243, -0.2
        %v290 = vsel %vm288, 1, 0
        %v291 = vsel %vm289, 1, 0
        %v292 = vcvt.s32.f32 %v290
        %v293 = vcvt.s32.f32 %v291
        %vm294 = vcmp.ge.f32.partialorder %v242, 0.2
        %vm295 = vcmp.ge.f32.partialorder %v243, 0.2
        %v296 = vsel %vm294, 1, 0
        %v297 = vsel %vm295, 1, 0
        %v298 = vcvt.s32.f32 %v296
        %v299 = vcvt.s32.f32 %v297
        %vm300 = vcmp.ge.f32.partialorder %v242, 0.6
        %vm301 = vcmp.ge.f32.partialorder %v243, 0.6
        %v302 = vsel %vm300, 1, 0
        %v303 = vsel %vm301, 1, 0
        %v304 = vcvt.s32.f32 %v302
        %v305 = vcvt.s32.f32 %v303
        %vm306 = vcmp.ge.f32.partialorder %v242, 1.0
        %vm307 = vcmp.ge.f32.partialorder %v243, 1.0
        %v308 = vsel %vm306, 1, 0
        %v309 = vsel %vm307, 1, 0
        %v310 = vcvt.s32.f32 %v308
        %v311 = vcvt.s32.f32 %v309
        %vm312 = vcmp.ge.f32.partialorder %v242, 1.4
        %vm313 = vcmp.ge.f32.partialorder %v243, 1.4
        %v314 = vsel %vm312, 1, 0
        %v315 = vsel %vm313, 1, 0
        %v316 = vcvt.s32.f32 %v314
        %v317 = vcvt.s32.f32 %v315
        %vm318 = vcmp.ge.f32.partialorder %v242, 1.8
        %vm319 = vcmp.ge.f32.partialorder %v243, 1.8
        %v320 = vsel %vm318, 1, 0
        %v321 = vsel %vm319, 1, 0
        %v322 = vcvt.s32.f32 %v320
        %v323 = vcvt.s32.f32 %v321
        %vm324 = vcmp.ge.f32.partialorder %v242, 2.2
        %vm325 = vcmp.ge.f32.partialorder %v243, 2.2
        %v326 = vsel %vm324, 1, 0
        %v327 = vsel %vm325, 1, 0
        %v328 = vcvt.s32.f32 %v326
        %v329 = vcvt.s32.f32 %v327
        %v330 = vsub.f32 %v262, %v268
        %v331 = vsub.f32 %v263, %v269
        %v332 = vsub.f32 %v268, %v274
        %v333 = vsub.f32 %v269, %v275
        %v334 = vsub.f32 %v274, %v280
        %v335 = vsub.f32 %v275, %v281
        %v336 = vsub.f32 %v280, %v286
        %v337 = vsub.f32 %v281, %v287
        %v338 = vsub.f32 %v286, %v292
        %v339 = vsub.f32 %v287, %v293
        %v340 = vsub.f32 %v292, %v298
        %v341 = vsub.f32 %v293, %v299
        %v342 = vsub.f32 %v298, %v304
        %v343 = vsub.f32 %v299, %v305
        %v344 = vsub.f32 %v304, %v310
        %v345 = vsub.f32 %v305, %v311
        %v346 = vsub.f32 %v310, %v316
        %v347 = vsub.f32 %v311, %v317
        %v348 = vsub.f32 %v316, %v322
        %v349 = vsub.f32 %v317, %v323
        %v350 = vsub.f32 %v322, %v328
        %v351 = vsub.f32 %v323, %v329
        %v352 = vsub.f32 %v242, -2.2
        %v353 = vsub.f32 %v243, -2.2
        %v354 = vmul.f32 %v352, 2.5
        %v355 = vmul.f32 %v353, 2.5
        %v356 = vsub.f32 %v330, %v332
        %v357 = vsub.f32 %v331, %v333
        %v358 = vmul.f32 %v354, %v356
        %v359 = vmul.f32 %v355, %v357
        %v360 = vmul.f32 %v332, 2.0
        %v361 = vmul.f32 %v333, 2.0
        %v362 = vadd.f32 %v358, %v360
        %v363 = vadd.f32 %v359, %v361
        %v364 = vsub.f32 %v354, 1.0
        %v365 = vsub.f32 %v355, 1.0
        %v366 = vsub.f32 %v332, %v334
        %v367 = vsub.f32 %v333, %v335
        %v368 = vmul.f32 %v364, %v366
        %v369 = vmul.f32 %v365, %v367
        %v370 = vmul.f32 %v334, 2.0
        %v371 = vmul.f32 %v335, 2.0
        %v372 = vadd.f32 %v368, %v370
        %v373 = vadd.f32 %v369, %v371
        %v374 = vsub.f32 %v354, 2.0
        %v375 = vsub.f32 %v355, 2.0
        %v376 = vsub.f32 %v334, %v336
        %v377 = vsub.f32 %v335, %v337
        %v378 = vmul.f32 %v374, %v376
        %v379 = vmul.f32 %v375, %v377
        %v380 = vmul.f32 %v336, 2.0
        %v381 = vmul.f32 %v337, 2.0
        %v382 = vadd.f32 %v378, %v380
        %v383 = vadd.f32 %v379, %v381
        %v384 = vsub.f32 %v354, 3.0
        %v385 = vsub.f32 %v355, 3.0
        %v386 = vsub.f32 %v336, %v338
        %v387 = vsub.f32 %v337, %v339
        %v388 = vmul.f32 %v384, %v386
        %v389 = vmul.f32 %v385, %v387
        %v390 = vmul.f32 %v338, 2.0
        %v391 = vmul.f32 %v339, 2.0
        %v392 = vadd.f32 %v388, %v390
        %v393 = vadd.f32 %v389, %v391
        %v394 = vsub.f32 %v354, 4.0
        %v395 = vsub.f32 %v355, 4.0
        %v396 = vsub.f32 %v338, %v340
        %v397 = vsub.f32 %v339, %v341
        %v398 = vmul.f32 %v394, %v396
        %v399 = vmul.f32 %v395, %v397
        %v400 = vmul.f32 %v340, 2.0
        %v401 = vmul.f32 %v341, 2.0
        %v402 = vadd.f32 %v398, %v400
        %v403 = vadd.f32 %v399, %v401
        %v404 = vsub.f32 %v354, 5.0
        %v405 = vsub.f32 %v355, 5.0
        %v406 = vsub.f32 %v340, %v342
        %v407 = vsub.f32 %v341, %v343
        %v408 = vmul.f32 %v404, %v406
        %v409 = vmul.f32 %v405, %v407
        %v410 = vmul.f32 %v342, 2.0
        %v411 = vmul.f32 %v343, 2.0
        %v412 = vadd.f32 %v408, %v410
        %v413 = vadd.f32 %v409, %v411
        %v414 = vsub.f32 %v354, 6.0
        %v415 = vsub.f32 %v355, 6.0
        %v416 = vsub.f32 %v342, %v344
        %v417 = vsub.f32 %v343, %v345
        %v418 = vmul.f32 %v414, %v416
        %v419 = vmul.f32 %v415, %v417
        %v420 = vmul.f32 %v344, 2.0
        %v421 = vmul.f32 %v345, 2.0
        %v422 = vadd.f32 %v418, %v420
        %v423 = vadd.f32 %v419, %v421
        %v424 = vsub.f32 %v354, 7.0
        %v425 = vsub.f32 %v355, 7.0
        %v426 = vsub.f32 %v344, %v346
        %v427 = vsub.f32 %v345, %v347
        %v428 = vmul.f32 %v424, %v426
        %v429 = vmul.f32 %v425, %v427
        %v430 = vmul.f32 %v346, 2.0
        %v431 = vmul.f32 %v347, 2.0
        %v432 = vadd.f32 %v428, %v430
        %v433 = vadd.f32 %v429, %v431
        %v434 = vsub.f32 %v354, 8.0
        %v435 = vsub.f32 %v355, 8.0
        %v436 = vsub.f32 %v346, %v348
        %v437 = vsub.f32 %v347, %v349
        %v438 = vmul.f32 %v434, %v436
        %v439 = vmul.f32 %v435, %v437
        %v440 = vmul.f32 %v348, 2.0
        %v441 = vmul.f32 %v349, 2.0
        %v442 = vadd.f32 %v438, %v440
        %v443 = vadd.f32 %v439, %v441
        %v444 = vsub.f32 %v354, 9.0
        %v445 = vsub.f32 %v355, 9.0
        %v446 = vsub.f32 %v348, %v350
        %v447 = vsub.f32 %v349, %v351
        %v448 = vmul.f32 %v444, %v446
        %v449 = vmul.f32 %v445, %v447
        %v450 = vmul.f32 %v350, 2.0
        %v451 = vmul.f32 %v351, 2.0
        %v452 = vadd.f32 %v448, %v450
        %v453 = vadd.f32 %v449, %v451
        %v454 = vmul.f32 %v352, 1.25
        %v455 = vmul.f32 %v353, 1.25
        %v456 = vsub.f32 %v362, %v372
        %v457 = vsub.f32 %v363, %v373
        %v458 = vmul.f32 %v454, %v456
        %v459 = vmul.f32 %v455, %v457
        %v460 = vmul.f32 %v372, 1.5
        %v461 = vmul.f32 %v373, 1.5
        %v462 = vadd.f32 %v458, %v460
        %v463 = vadd.f32 %v459, %v461
        %v464 = vsub.f32 %v454, 0.5
        %v465 = vsub.f32 %v455, 0.5
        %v466 = vsub.f32 %v372, %v382
        %v467 = vsub.f32 %v373, %v383
        %v468 = vmul.f32 %v464, %v466
        %v469 = vmul.f32 %v465, %v467
        %v470 = vmul.f32 %v382, 1.5
        %v471 = vmul.f32 %v383, 1.5
        %v472 = vadd.f32 %v468, %v470
        %v473 = vadd.f32 %v469, %v471
        %v474 = vsub.f32 %v454, 1.0
        %v475 = vsub.f32 %v455, 1.0
        %v476 = vsub.f32 %v382, %v392
        %v477 = vsub.f32 %v383, %v393
        %v478 = vmul.f32 %v474, %v476
        %v479 = vmul.f32 %v475, %v477
        %v480 = vmul.f32 %v392, 1.5
        %v481 = vmul.f32 %v393, 1.5
        %v482 = vadd.f32 %v478, %v480
        %v483 = vadd.f32 %v479, %v481
        %v484 = vsub.f32 %v454, 1.5
        %v485 = vsub.f32 %v455, 1.5
        %v486 = vsub.f32 %v392, %v402
        %v487 = vsub.f32 %v393, %v403
        %v488 = vmul.f32 %v484, %v486
        %v489 = vmul.f32 %v485, %v487
        %v490 = vmul.f32 %v402, 1.5
        %v491 = vmul.f32 %v403, 1.5
        %v492 = vadd.f32 %v488, %v490
        %v493 = vadd.f32 %v489, %v491
        %v494 = vsub.f32 %v454, 2.0
        %v495 = vsub.f32 %v455, 2.0
        %v496 = vsub.f32 %v402, %v412
        %v497 = vsub.f32 %v403, %v413
        %v498 = vmul.f32 %v494, %v496
        %v499 = vmul.f32 %v495, %v497
        %v500 = vmul.f32 %v412, 1.5
        %v501 = vmul.f32 %v413, 1.5
        %v502 = vadd.f32 %v498, %v500
        %v503 = vadd.f32 %v499, %v501
        %v504 = vsub.f32 %v454, 2.5
        %v505 = vsub.f32 %v455, 2.5
        %v506 = vsub.f32 %v412, %v422
        %v507 = vsub.f32 %v413, %v423
        %v508 = vmul.f32 %v504, %v506
        %v509 = vmul.f32 %v505, %v507
        %v510 = vmul.f32 %v422, 1.5
        %v511 = vmul.f32 %v423, 1.5
        %v512 = vadd.f32 %v508, %v510
        %v513 = vadd.f32 %v509, %v511
        %v514 = vsub.f32 %v454, 3.0
        %v515 = vsub.f32 %v455, 3.0
        %v516 = vsub.f32 %v422, %v432
        %v517 = vsub.f32 %v423, %v433
        %v518 = vmul.f32 %v514, %v516
        %v519 = vmul.f32 %v515, %v517
        %v520 = vmul.f32 %v432, 1.5
        %v521 = vmul.f32 %v433, 1.5
        %v522 = vadd.f32 %v518, %v520
        %v523 = vadd.f32 %v519, %v521
        %v524 = vsub.f32 %v454, 3.5
        %v525 = vsub.f32 %v455, 3.5
        %v526 = vsub.f32 %v432, %v442
        %v527 = vsub.f32 %v433, %v443
        %v528 = vmul.f32 %v524, %v526
        %v529 = vmul.f32 %v525, %v527
        %v530 = vmul.f32 %v442, 1.5
        %v531 = vmul.f32 %v443, 1.5
        %v532 = vadd.f32 %v528, %v530
        %v533 = vadd.f32 %v529, %v531
        %v534 = vsub.f32 %v454, 4.0
        %v535 = vsub.f32 %v455, 4.0
        %v536 = vsub.f32 %v442, %v452
        %v537 = vsub.f32 %v443, %v453
        %v538 = vmul.f32 %v534, %v536
        %v539 = vmul.f32 %v535, %v537
        %v540 = vmul.f32 %v452, 1.5
        %v541 = vmul.f32 %v453, 1.5
        %v542 = vadd.f32 %v538, %v540
        %v543 = vadd.f32 %v539, %v541
        %v544 = vmul.f32 %v352, 0.8333333
        %v545 = vmul.f32 %v353, 0.8333333
        %v546 = vsub.f32 %v462, %v472
        %v547 = vsub.f32 %v463, %v473
        %v548 = vmul.f32 %v544, %v546
        %v549 = vmul.f32 %v545, %v547
        %v550 = vmul.f32 %v472, 1.3333334
        %v551 = vmul.f32 %v473, 1.3333334
        %v552 = vadd.f32 %v548, %v550
        %v553 = vadd.f32 %v549, %v551
        %v554 = vsub.f32 %v544, 0.33333334
        %v555 = vsub.f32 %v545, 0.33333334
        %v556 = vsub.f32 %v472, %v482
        %v557 = vsub.f32 %v473, %v483
        %v558 = vmul.f32 %v554, %v556
        %v559 = vmul.f32 %v555, %v557
        %v560 = vmul.f32 %v482, 1.3333334
        %v561 = vmul.f32 %v483, 1.3333334
        %v562 = vadd.f32 %v558, %v560
        %v563 = vadd.f32 %v559, %v561
        %v564 = vsub.f32 %v544, 0.6666667
        %v565 = vsub.f32 %v545, 0.6666667
        %v566 = vsub.f32 %v482, %v492
        %v567 = vsub.f32 %v483, %v493
        %v568 = vmul.f32 %v564, %v566
        %v569 = vmul.f32 %v565, %v567
        %v570 = vmul.f32 %v492, 1.3333334
        %v571 = vmul.f32 %v493, 1.3333334
        %v572 = vadd.f32 %v568, %v570
        %v573 = vadd.f32 %v569, %v571
        %v574 = vsub.f32 %v544, 1.0
        %v575 = vsub.f32 %v545, 1.0
        %v576 = vsub.f32 %v492, %v502
        %v577 = vsub.f32 %v493, %v503
        %v578 = vmul.f32 %v574, %v576
        %v579 = vmul.f32 %v575, %v577
        %v580 = vmul.f32 %v502, 1.3333334
        %v581 = vmul.f32 %v503, 1.3333334
        %v582 = vadd.f32 %v578, %v580
        %v583 = vadd.f32 %v579, %v581
        %v584 = vsub.f32 %v544, 1.3333334
        %v585 = vsub.f32 %v545, 1.3333334
        %v586 = vsub.f32 %v502, %v512
        %v587 = vsub.f32 %v503, %v513
        %v588 = vmul.f32 %v584, %v586
        %v589 = vmul.f32 %v585, %v587
        %v590 = vmul.f32 %v512, 1.3333334
        %v591 = vmul.f32 %v513, 1.3333334
        %v592 = vadd.f32 %v588, %v590
        %v593 = vadd.f32 %v589, %v591
        %v594 = vsub.f32 %v544, 1.6666666
        %v595 = vsub.f32 %v545, 1.6666666
        %v596 = vsub.f32 %v512, %v522
        %v597 = vsub.f32 %v513, %v523
        %v598 = vmul.f32 %v594, %v596
        %v599 = vmul.f32 %v595, %v597
        %v600 = vmul.f32 %v522, 1.3333334
        %v601 = vmul.f32 %v523, 1.3333334
        %v602 = vadd.f32 %v598, %v600
        %v603 = vadd.f32 %v599, %v601
        %v604 = vsub.f32 %v544, 2.0
        %v605 = vsub.f32 %v545, 2.0
        %v606 = vsub.f32 %v522, %v532
        %v607 = vsub.f32 %v523, %v533
        %v608 = vmul.f32 %v604, %v606
        %v609 = vmul.f32 %v605, %v607
        %v610 = vmul.f32 %v532, 1.3333334
        %v611 = vmul.f32 %v533, 1.3333334
        %v612 = vadd.f32 %v608, %v610
        %v613 = vadd.f32 %v609, %v611
        %v614 = vsub.f32 %v544, 2.3333333
        %v615 = vsub.f32 %v545, 2.3333333
        %v616 = vsub.f32 %v532, %v542
        %v617 = vsub.f32 %v533, %v543
        %v618 = vmul.f32 %v614, %v616
        %v619 = vmul.f32 %v615, %v617
        %v620 = vmul.f32 %v542, 1.3333334
        %v621 = vmul.f32 %v543, 1.3333334
        %v622 = vadd.f32 %v618, %v620
        %v623 = vadd.f32 %v619, %v621
        %v624 = vpack.c.bf16 %v256, %v256
        %v625 = vpack.c.bf16 %v257, %v257
        %v626 = vpack.c.bf16 %v552, %v552
        %v627 = vpack.c.bf16 %v553, %v553
        %v628 = vpack.c.bf16 %v562, %v562
        %v629 = vpack.c.bf16 %v563, %v563
        %v630 = vpack.c.bf16 %v572, %v572
        %v631 = vpack.c.bf16 %v573, %v573
        %v632 = vpack.c.bf16 %v582, %v582
        %v633 = vpack.c.bf16 %v583, %v583
        %v634 = vpack.c.bf16 %v592, %v592
        %v635 = vpack.c.bf16 %v593, %v593
        %v636 = vpack.c.bf16 %v602, %v602
        %v637 = vpack.c.bf16 %v603, %v603
        %v638 = vpack.c.bf16 %v612, %v612
        %v639 = vpack.c.bf16 %v613, %v613
        %v640 = vpack.c.bf16 %v622, %v622
        %v641 = vpack.c.bf16 %v623, %v623
        %v644 = vrot.slane %v626, 6
        %v645 = vrot.slane %v627, 6
        %v648 = vrot.slane %v628, 4
        %v649 = vrot.slane %v629, 4
        %v652 = vrot.slane %v630, 2
        %v653 = vrot.slane %v631, 2
        %v656 = vrot.slane %v634, 6
        %v657 = vrot.slane %v635, 6
        %v660 = vrot.slane %v636, 4
        %v661 = vrot.slane %v637, 4
        %v664 = vrot.slane %v638, 2
        %v665 = vrot.slane %v639, 2
        %vm666 = vcmask 1041408
        %v669 = vsel %vm666, %v624, %v644
        %v672 = vsel %vm666, %v625, %v645
        %vm673 = vcmask 1043456
        %v675 = vsel %vm673, %v669, %v648
        %v677 = vsel %vm673, %v672, %v649
        %vm678 = vcmask 1045504
        %v680 = vsel %vm678, %v675, %v652
        %v683 = vsel %vm678, %v677, %v653
        %v686 = vsel %vm666, %v632, %v656
        %v689 = vsel %vm666, %v633, %v657
        %v691 = vsel %vm673, %v686, %v660
        %v693 = vsel %vm673, %v689, %v661
        %v695 = vsel %vm678, %v691, %v664
        %v698 = vsel %vm678, %v693, %v665
        %v699 = vld [vmem:[#allocation7] sm:$0xf]
        %s700 = scalar_lea.vmem [#allocation7], 4
        %v701 = vld [vmem:[%s700] sm:$0xf]
        %708 = vrot.lane.b32.xlu0 %v680, 127
        %v709 = vpop.permute.xlu0 %708
        %710 = vrot.lane.b32.xlu0 %v683, 127
        %v711 = vpop.permute.xlu0 %710
        %712 = vrot.lane.b32.xlu0 %v695, 127
        %v713 = vpop.permute.xlu0 %712
        %714 = vrot.lane.b32.xlu0 %v698, 127
        %v715 = vpop.permute.xlu0 %714
        %716 = vrot.lane.b32.xlu0 %v640, 127
        %v717 = vpop.permute.xlu0 %716
        %718 = vrot.lane.b32.xlu0 %v641, 127
        %v719 = vpop.permute.xlu0 %718
        %vm720 = vcmask 1039360
        %v721 = vsel %vm720, %v709, %v711
        %v722 = vsel %vm720, %v713, %v715
        %v723 = vsel %vm720, %v717, %v719
        %vm726 = vcmask 293888
        %v728 = vsel %vm726, %v701, 0
        %v731 = vsel %vm666, %v723, 0
        %733 = vmatprep.subr.bf16.mxu0 0
        %734 = vmatpush1.bf16.msra.mxu0 %v721
        %735 = vmatprep.subr.bf16.mxu0 0
        %736 = vmatpush1.bf16.msra.mxu0 %v722
        %737 = vmatprep.subr.bf16.mxu0 0
        %738 = vmatpush1.bf16.msra.mxu0 %v731
        %739 = vmatprep.subr.bf16.mxu0 0
        %740 = vmatpush1.bf16.msra.mxu0 0
        %741 = vmatprep.subr.bf16.mxu0 0
        %742 = vmatpush1.bf16.msra.mxu0 0
        %743 = vmatprep.subr.bf16.mxu0 0
        %744 = vmatpush1.bf16.msra.mxu0 0
        %745 = vmatprep.subr.bf16.mxu0 0
        %746 = vmatpush1.bf16.msra.mxu0 0
        %747 = vmatprep.subr.bf16.mxu0 0
        %748 = vmatpush1.bf16.msra.mxu0 0
        %749 = vmatprep.subr.bf16.mxu0 0
        %750 = vmatpush1.bf16.msra.mxu0 0
        %751 = vmatprep.subr.bf16.mxu0 0
        %752 = vmatpush1.bf16.msra.mxu0 0
        %753 = vmatprep.subr.bf16.mxu0 0
        %754 = vmatpush1.bf16.msra.mxu0 0
        %755 = vmatprep.subr.bf16.mxu0 0
        %756 = vmatpush1.bf16.msra.mxu0 0
        %757 = vmatprep.subr.bf16.mxu0 0
        %758 = vmatpush1.bf16.msra.mxu0 0
        %759 = vmatprep.subr.bf16.mxu0 0
        %760 = vmatpush1.bf16.msra.mxu0 0
        %761 = vmatprep.subr.bf16.mxu0 0
        %762 = vmatpush1.bf16.msra.mxu0 0
        %763 = vmatprep.subr.bf16.mxu0 0
        %764 = vmatpush1.bf16.msra.mxu0 0
        %765 = vmatprep.mubr.bf16.mxu0 0
        %766 = vmatmul.mubr.bf16.gmra.mrb[0].mxu0 %v728
        %v767 = vpop.f32.mrb[0].mxu0
        %v768 = vadd.f32 0.0, %v767
        %v769 = vpop.f32.mrb[0].mxu0
        %v770 = vpop.f32.mrb[0].mxu0
        %v771 = vpop.f32.mrb[0].mxu0
        %772 = vdwg.mxu0
        %v774 = vsel %vm726, %v699, 0
        %v777 = vsel %vm666, %v640, 0
        %779 = vmatprep.subr.bf16.mxu0 0
        %780 = vmatpush1.bf16.msra.mxu0 %v680
        %781 = vmatprep.subr.bf16.mxu0 0
        %782 = vmatpush1.bf16.msra.mxu0 %v695
        %783 = vmatprep.subr.bf16.mxu0 0
        %784 = vmatpush1.bf16.msra.mxu0 %v777
        %785 = vmatprep.subr.bf16.mxu0 0
        %786 = vmatpush1.bf16.msra.mxu0 0
        %787 = vmatprep.subr.bf16.mxu0 0
        %788 = vmatpush1.bf16.msra.mxu0 0
        %789 = vmatprep.subr.bf16.mxu0 0
        %790 = vmatpush1.bf16.msra.mxu0 0
        %791 = vmatprep.subr.bf16.mxu0 0
        %792 = vmatpush1.bf16.msra.mxu0 0
        %793 = vmatprep.subr.bf16.mxu0 0
        %794 = vmatpush1.bf16.msra.mxu0 0
        %795 = vmatprep.subr.bf16.mxu0 0
        %796 = vmatpush1.bf16.msra.mxu0 0
        %797 = vmatprep.subr.bf16.mxu0 0
        %798 = vmatpush1.bf16.msra.mxu0 0
        %799 = vmatprep.subr.bf16.mxu0 0
        %800 = vmatpush1.bf16.msra.mxu0 0
        %801 = vmatprep.subr.bf16.mxu0 0
        %802 = vmatpush1.bf16.msra.mxu0 0
        %803 = vmatprep.subr.bf16.mxu0 0
        %804 = vmatpush1.bf16.msra.mxu0 0
        %805 = vmatprep.subr.bf16.mxu0 0
        %806 = vmatpush1.bf16.msra.mxu0 0
        %807 = vmatprep.subr.bf16.mxu0 0
        %808 = vmatpush1.bf16.msra.mxu0 0
        %809 = vmatprep.subr.bf16.mxu0 0
        %810 = vmatpush1.bf16.msra.mxu0 0
        %811 = vmatprep.mubr.bf16.mxu0 0
        %812 = vmatmul.mubr.bf16.gmra.mrb[0].mxu0 %v774
        %v813 = vpop.f32.mrb[0].mxu0
        %v814 = vadd.f32 %v768, %v813
        %v815 = vpop.f32.mrb[0].mxu0
        %v816 = vpop.f32.mrb[0].mxu0
        %v817 = vpop.f32.mrb[0].mxu0
        %818 = vdwg.mxu0
        %s819 = scalar_lea.vmem [#allocation7], 8
        %v820 = vld [vmem:[%s819] sm:$0xf]
        %821 = vrot.lane.b32.xlu0 %v680, 112
        %v822 = vpop.permute.xlu0 %821
        %823 = vrot.lane.b32.xlu0 %v683, 112
        %v824 = vpop.permute.xlu0 %823
        %825 = vrot.lane.b32.xlu0 %v695, 112
        %v826 = vpop.permute.xlu0 %825
        %827 = vrot.lane.b32.xlu0 %v698, 112
        %v828 = vpop.permute.xlu0 %827
        %829 = vrot.lane.b32.xlu0 %v640, 112
        %v830 = vpop.permute.xlu0 %829
        %831 = vrot.lane.b32.xlu0 %v641, 112
        %v832 = vpop.permute.xlu0 %831
        %vm833 = vcmask 916480
        %v834 = vsel %vm833, %v822, %v824
        %v835 = vsel %vm833, %v826, %v828
        %v836 = vsel %vm833, %v830, %v832
        %v840 = vsel %vm726, %v820, 0
        %v843 = vsel %vm666, %v836, 0
        %845 = vmatprep.subr.bf16.mxu0 0
        %846 = vmatpush1.bf16.msra.mxu0 %v834
        %847 = vmatprep.subr.bf16.mxu0 0
        %848 = vmatpush1.bf16.msra.mxu0 %v835
        %849 = vmatprep.subr.bf16.mxu0 0
        %850 = vmatpush1.bf16.msra.mxu0 %v843
        %851 = vmatprep.subr.bf16.mxu0 0
        %852 = vmatpush1.bf16.msra.mxu0 0
        %853 = vmatprep.subr.bf16.mxu0 0
        %854 = vmatpush1.bf16.msra.mxu0 0
        %855 = vmatprep.subr.bf16.mxu0 0
        %856 = vmatpush1.bf16.msra.mxu0 0
        %857 = vmatprep.subr.bf16.mxu0 0
        %858 = vmatpush1.bf16.msra.mxu0 0
        %859 = vmatprep.subr.bf16.mxu0 0
        %860 = vmatpush1.bf16.msra.mxu0 0
        %861 = vmatprep.subr.bf16.mxu0 0
        %862 = vmatpush1.bf16.msra.mxu0 0
        %863 = vmatprep.subr.bf16.mxu0 0
        %864 = vmatpush1.bf16.msra.mxu0 0
        %865 = vmatprep.subr.bf16.mxu0 0
        %866 = vmatpush1.bf16.msra.mxu0 0
        %867 = vmatprep.subr.bf16.mxu0 0
        %868 = vmatpush1.bf16.msra.mxu0 0
        %869 = vmatprep.subr.bf16.mxu0 0
        %870 = vmatpush1.bf16.msra.mxu0 0
        %871 = vmatprep.subr.bf16.mxu0 0
        %872 = vmatpush1.bf16.msra.mxu0 0
        %873 = vmatprep.subr.bf16.mxu0 0
        %874 = vmatpush1.bf16.msra.mxu0 0
        %875 = vmatprep.subr.bf16.mxu0 0
        %876 = vmatpush1.bf16.msra.mxu0 0
        %877 = vmatprep.mubr.bf16.mxu0 0
        %878 = vmatmul.mubr.bf16.gmra.mrb[0].mxu0 %v840
        %v879 = vpop.f32.mrb[0].mxu0
        %v880 = vadd.f32 0.0, %v879
        %v881 = vpop.f32.mrb[0].mxu0
        %v882 = vpop.f32.mrb[0].mxu0
        %v883 = vpop.f32.mrb[0].mxu0
        %884 = vdwg.mxu0
        %v885 = vadd.f32 %v814, %v880
        %s886 = scalar_lea.vmem [#allocation7], 12
        %v887 = vld [vmem:[%s886] sm:$0xf]
        %888 = vrot.lane.b32.xlu0 %v680, 111
        %v889 = vpop.permute.xlu0 %888
        %890 = vrot.lane.b32.xlu0 %v683, 111
        %v891 = vpop.permute.xlu0 %890
        %892 = vrot.lane.b32.xlu0 %v695, 111
        %v893 = vpop.permute.xlu0 %892
        %894 = vrot.lane.b32.xlu0 %v698, 111
        %v895 = vpop.permute.xlu0 %894
        %896 = vrot.lane.b32.xlu0 %v640, 111
        %v897 = vpop.permute.xlu0 %896
        %898 = vrot.lane.b32.xlu0 %v641, 111
        %v899 = vpop.permute.xlu0 %898
        %vm900 = vcmask 908288
        %v901 = vsel %vm900, %v889, %v891
        %v902 = vsel %vm900, %v893, %v895
        %v903 = vsel %vm900, %v897, %v899
        %v907 = vsel %vm726, %v887, 0
        %v910 = vsel %vm666, %v903, 0
        %912 = vmatprep.subr.bf16.mxu0 0
        %913 = vmatpush1.bf16.msra.mxu0 %v901
        %914 = vmatprep.subr.bf16.mxu0 0
        %915 = vmatpush1.bf16.msra.mxu0 %v902
        %916 = vmatprep.subr.bf16.mxu0 0
        %917 = vmatpush1.bf16.msra.mxu0 %v910
        %918 = vmatprep.subr.bf16.mxu0 0
        %919 = vmatpush1.bf16.msra.mxu0 0
        %920 = vmatprep.subr.bf16.mxu0 0
        %921 = vmatpush1.bf16.msra.mxu0 0
        %922 = vmatprep.subr.bf16.mxu0 0
        %923 = vmatpush1.bf16.msra.mxu0 0
        %924 = vmatprep.subr.bf16.mxu0 0
        %925 = vmatpush1.bf16.msra.mxu0 0
        %926 = vmatprep.subr.bf16.mxu0 0
        %927 = vmatpush1.bf16.msra.mxu0 0
        %928 = vmatprep.subr.bf16.mxu0 0
        %929 = vmatpush1.bf16.msra.mxu0 0
        %930 = vmatprep.subr.bf16.mxu0 0
        %931 = vmatpush1.bf16.msra.mxu0 0
        %932 = vmatprep.subr.bf16.mxu0 0
        %933 = vmatpush1.bf16.msra.mxu0 0
        %934 = vmatprep.subr.bf16.mxu0 0
        %935 = vmatpush1.bf16.msra.mxu0 0
        %936 = vmatprep.subr.bf16.mxu0 0
        %937 = vmatpush1.bf16.msra.mxu0 0
        %938 = vmatprep.subr.bf16.mxu0 0
        %939 = vmatpush1.bf16.msra.mxu0 0
        %940 = vmatprep.subr.bf16.mxu0 0
        %941 = vmatpush1.bf16.msra.mxu0 0
        %942 = vmatprep.subr.bf16.mxu0 0
        %943 = vmatpush1.bf16.msra.mxu0 0
        %944 = vmatprep.mubr.bf16.mxu0 0
        %945 = vmatmul.mubr.bf16.gmra.mrb[0].mxu0 %v907
        %v946 = vpop.f32.mrb[0].mxu0
        %v947 = vadd.f32 0.0, %v946
        %v948 = vpop.f32.mrb[0].mxu0
        %v949 = vpop.f32.mrb[0].mxu0
        %v950 = vpop.f32.mrb[0].mxu0
        %951 = vdwg.mxu0
        %v952 = vadd.f32 %v885, %v947
        %953 = vst [vmem:[%s239] sm:$0xff] %v952
        %s954 = sand.u32 %s106, 1
        %s955 = scalar_lea.sflag [#allocation4], %s954
        %s956 = sand.u32 %s106, 1
        %s957 = smul.addr %s956, 8
        %s958 = scalar_lea.vmem [#allocation8], %s957
        // Predicated region
        $region45: #{tpu_custom_call.1} parent=31 // pred_check
          %p959 = pneg %p116
        $region46: #{tpu_custom_call.1} parent=31 // pred_check_branch
          %961 = sbr.rel (%p959) target = $region48
        $region47: #{tpu_custom_call.1} parent=31 // pred_region
          %s963 = ssub.s32 128, 128
          %964 = vsyncadd %s955, %s963
          %s965 = smul.addr %s23, 128
          %s966 = scalar_lea.hbm %s3, %s965
          %s968 = sshll.u32 %s958, 4
          %s969 = int_to_ptr.vmem [resolvable:$true] %s968
          %971 = dma.vmem_to_hbm [thread:$0]  %s969, 128, %s966, %s955
        $region48: #{tpu_custom_call.1} parent=31 // pred_fallthru
          _
      $region32: #{tpu_custom_call.1} parent=5 // pred_fallthru
        _
      %p972 = scmp.le.s32.totalorder 2, %s18
      // Predicated region
      $region49: #{tpu_custom_call.1} parent=5 // pred_check
        %p973 = pneg %p972
      $region50: #{tpu_custom_call.1} parent=5 // pred_check_branch
        %975 = sbr.rel (%p973) target = $region52
      $region51: #{tpu_custom_call.1} parent=5 // pred_region
        %s976 = ssub.s32 %s18, 2
        // Predicated region
        $region53: #{tpu_custom_call.1} parent=51 // pred_check
          %p977 = pneg %p122
        $region54: #{tpu_custom_call.1} parent=51 // pred_check_branch
          %979 = sbr.rel (%p977) target = $region56
        $region55: #{tpu_custom_call.1} parent=51 // pred_region
          %s980 = sand.u32 %s107, 1
          %s981 = scalar_lea.sflag [#allocation4], %s980
          %s982 = sand.u32 %s107, 1
          %s983 = smul.addr %s982, 8
          %s984 = scalar_lea.vmem [#allocation8], %s983
          %985 = dma.done %s981, 128
        $region56: #{tpu_custom_call.1} parent=51 // pred_fallthru
          _
      $region52: #{tpu_custom_call.1} parent=5 // pred_fallthru
        _
    $region6: #{tpu_custom_call.1} parent=1 // loop_footer
      %s22 = sadd.s32 1, %s18
    $region7: #{tpu_custom_call.1} parent=1 // loop_footer_branch
      %17 = sbr.rel target = $region3
    $region8: #{tpu_custom_call.1} parent=1 // loop_exit
      _
    %986 = vsyncpa [#allocation3], 1
    %s987 = scalar_lea.sflag [#allocation3], 1
    %988 = vsyncpa %s987, 1
    %989 = vsyncpa [#allocation6], 1
    %s990 = scalar_lea.sflag [#allocation6], 1
    %991 = vsyncpa %s990, 1
    %992 = vsyncpa [#allocation4], 1
    %s993 = scalar_lea.sflag [#allocation4], 1
    %994 = vsyncpa %s993, 1

</llo_original>
